<compile_context>
chip_gen: v5e
topology: v5e:2x2
jax: 0.10.0
libtpu: 0.0.40
codegen_flags: <defaults>
</compile_context>

<pallas_src>
import functools

import jax
import jax.numpy as jnp
from jax.experimental import pallas as pl
from jax.experimental.pallas import tpu as pltpu


def _round_up(x, m):
    return (x + m - 1) // m * m


def _pick_tile(n, candidates):
    for c in candidates:
        if c <= n and n % c == 0:
            return c
    return n  # full dim (always a legal block size)


# ---------------------------------------------------------------------------
# Kernel A: LSTM recurrence.  grid = (num_T_chunks,), sequential.
#   gx_ref : (T_blk, B, 4*Hp)  precomputed x-projection incl. biases + emotion
#   w_hh   : (Hp, 4*Hp)        recurrent weights, gate blocks lane-aligned
#   hs_ref : (T_blk, B, Hp)    hidden states (time-major)
#   h_ref/c_ref : (B, Hp)      state carried across chunks in VMEM scratch
# ---------------------------------------------------------------------------
def _lstm_recurrence_kernel(gx_ref, w_hh_ref, hs_ref, h_ref, c_ref,
                            *, t_total, t_blk):
    @pl.when(pl.program_id(0) == 0)
    def _():
        h_ref[...] = jnp.zeros_like(h_ref)
        c_ref[...] = jnp.zeros_like(c_ref)

    Hp = h_ref.shape[-1]
    w_hh = w_hh_ref[...]                     # hoisted out of the time loop

    # Do not run the (serial, expensive) recurrence over padded timesteps.
    t_valid = jnp.minimum(t_blk, t_total - pl.program_id(0) * t_blk)

    def step(t, carry):
        h, c = carry
        # only the h-recurrence matmul remains in the serial loop
        gates = gx_ref[t] + jnp.dot(h, w_hh, preferred_element_type=jnp.float32)
        # gate slices are lane-aligned because Hp % 128 == 0
        i_g = jax.nn.sigmoid(gates[:, 0 * Hp:1 * Hp])
        f_g = jax.nn.sigmoid(gates[:, 1 * Hp:2 * Hp])
        g_g = jnp.tanh(gates[:, 2 * Hp:3 * Hp])
        o_g = jax.nn.sigmoid(gates[:, 3 * Hp:4 * Hp])
        c_new = f_g * c + i_g * g_g
        h_new = o_g * jnp.tanh(c_new)
        hs_ref[t] = h_new
        return (h_new, c_new)

    h_fin, c_fin = jax.lax.fori_loop(0, t_valid, step, (h_ref[...], c_ref[...]))
    h_ref[...] = h_fin
    c_ref[...] = c_fin


# ---------------------------------------------------------------------------
# Kernel B: vocab projection, plain tiled 2-D matmul.
#   x_ref : (tm, Hp)   w_ref : (Hp, tn)   b_ref : (1, tn)   o_ref : (tm, tn)
# ---------------------------------------------------------------------------
def _fc_kernel(x_ref, w_ref, b_ref, o_ref):
    o_ref[...] = (jnp.dot(x_ref[...], w_ref[...],
                          preferred_element_type=jnp.float32) + b_ref[...])


def generator_forward(x_ids, emo, params, *, t_block=64):
    """x_ids: (B, T) int32, emo: (B, E) f32. Returns logits (B, T, V) f32."""
    emb_table = params["embedding"]          # (V, D_emb)
    w_ih = params["w_ih"]                    # (D_in, 4H)
    w_hh = params["w_hh"]                    # (H, 4H)
    b = params["b"]                          # (1, 4H)  (b_ih + b_hh)
    w_fc = params["w_fc"]                    # (H, V)
    b_fc = params["b_fc"]                    # (1, V)

    B, T = x_ids.shape
    D_emb = emb_table.shape[1]
    E = emo.shape[-1]
    H = w_hh.shape[0]
    V = w_fc.shape[1]

    Hp = _round_up(H, 128)
    Vp = _round_up(V, 128)
    f32 = jnp.float32

    # --- lane-aligned, zero-padded weight layouts (gate blocks of width Hp) ---
    w_ih_p = jnp.pad(w_ih.astype(f32).reshape(D_emb + E, 4, H),
                     ((0, 0), (0, 0), (0, Hp - H))).reshape(D_emb + E, 4 * Hp)
    b_p = jnp.pad(b.astype(f32).reshape(4, H),
                  ((0, 0), (0, Hp - H))).reshape(1, 4 * Hp)
    w_hh_p = jnp.pad(w_hh.astype(f32).reshape(H, 4, H),
                     ((0, Hp - H), (0, 0), (0, Hp - H))).reshape(Hp, 4 * Hp)
    w_fc_p = jnp.pad(w_fc.astype(f32), ((0, Hp - H), (0, Vp - V)))
    b_fc_p = jnp.pad(b_fc.astype(f32), ((0, 0), (0, Vp - V)))

    # --- hoisted input projection: one big matmul for ALL timesteps;
    #     emotion contribution + combined bias folded in once per sequence ---
    emb = jnp.take(emb_table, x_ids, axis=0).astype(f32)            # (B, T, D_emb)
    gx_const = emo.astype(f32) @ w_ih_p[D_emb:] + b_p               # (B, 4Hp)
    gx = jnp.einsum('btd,dg->btg', emb, w_ih_p[:D_emb]) + gx_const[:, None, :]

    # time-major, padded to a multiple of the per-grid-step chunk
    T_blk = min(t_block, T)
    T_pad = _round_up(T, T_blk)
    gx = jnp.transpose(gx, (1, 0, 2))                               # (T, B, 4Hp)
    if T_pad != T:
        gx = jnp.pad(gx, ((0, T_pad - T), (0, 0), (0, 0)))
    n_chunks = T_pad // T_blk

    # Explicit VMEM budget for kernel A (v7x: 64 MiB phys / 32 MiB scoped
    # default; v5e: 16 MiB scoped default).
    bytes_a = (T_blk * B * 4 * Hp * 4) * 2      # gx chunk, double-buffered
    bytes_a += (Hp * 4 * Hp * 4) * 1            # w_hh, single-buffered
    bytes_a += (T_blk * B * Hp * 4) * 2         # hs chunk, double-buffered
    bytes_a += 2 * B * Hp * 4                   # h/c scratch
    vmem_a = min(max(int(bytes_a * 1.3) + (2 << 20), 32 << 20), 100 << 20)

    # --- Pallas kernel A: the recurrence ---
    hs = pl.pallas_call(
        functools.partial(_lstm_recurrence_kernel, t_total=T, t_blk=T_blk),
        out_shape=jax.ShapeDtypeStruct((T_pad, B, Hp), f32),
        grid_spec=pltpu.PrefetchScalarGridSpec(
            num_scalar_prefetch=0,
            grid=(n_chunks,),
            in_specs=[
                pl.BlockSpec((T_blk, B, 4 * Hp), lambda i: (i, 0, 0)),
                # grid-invariant recurrent weights: single-buffered
                pl.BlockSpec((Hp, 4 * Hp), lambda i: (0, 0),
                             pipeline_mode=pl.Buffered(1)),
            ],
            out_specs=pl.BlockSpec((T_blk, B, Hp), lambda i: (i, 0, 0)),
            scratch_shapes=[
                pltpu.VMEM((B, Hp), f32),   # h
                pltpu.VMEM((B, Hp), f32),   # c
            ],
        ),
        compiler_params=pltpu.CompilerParams(
            dimension_semantics=("arbitrary",),     # sequential recurrence
            vmem_limit_bytes=vmem_a),
    )(gx, w_hh_p)

    # --- Pallas kernel B: vocab projection ---
    # hs is tiny relative to the logits, so a batch-major transpose in XLA is
    # cheap and lets every grid step run one clean (tm,Hp)x(Hp,tn) MXU dot;
    # the flat output reshapes back to (B, T_pad, Vp) for free.
    M = B * T_pad
    hs_bm = jnp.transpose(hs, (1, 0, 2)).reshape(M, Hp)             # (B*T_pad, Hp)

    tn_cands = tuple(c for c in (1024, 512, 256, 128)
                     if Hp * c * 4 * 2 <= (16 << 20)) or (128,)
    tm_cands = tuple(c for c in (512, 256, 128, 64, 32, 16, 8)
                     if c * Hp * 4 * 2 <= (8 << 20)) or (8,)
    tn = _pick_tile(Vp, tn_cands)
    tm = _pick_tile(M, tm_cands)

    bytes_b = (tm * Hp * 4 + Hp * tn * 4 + tn * 4 + tm * tn * 4) * 2
    vmem_b = min(max(int(bytes_b * 1.3) + (2 << 20), 32 << 20), 100 << 20)

    logits_flat = pl.pallas_call(
        _fc_kernel,
        out_shape=jax.ShapeDtypeStruct((M, Vp), f32),
        grid_spec=pltpu.PrefetchScalarGridSpec(
            num_scalar_prefetch=0,
            # V is the slow (outer) axis -> the (Hp, tn) weight tile stays
            # resident across the whole M loop; w_fc streams from HBM once.
            grid=(Vp // tn, M // tm),
            in_specs=[
                pl.BlockSpec((tm, Hp), lambda j, i: (i, 0)),
                pl.BlockSpec((Hp, tn), lambda j, i: (0, j)),
                pl.BlockSpec((1, tn), lambda j, i: (0, j)),
            ],
            out_specs=pl.BlockSpec((tm, tn), lambda j, i: (i, j)),
        ),
        compiler_params=pltpu.CompilerParams(
            dimension_semantics=("parallel", "parallel"),
            vmem_limit_bytes=vmem_b),
    )(hs_bm, w_fc_p, b_fc_p)

    logits = logits_flat.reshape(B, T_pad, Vp)[:, :T, :V]           # (B, T, V)
    return logits


def _reference_forward(x_ids, emo, params):
    """Pure-JAX reference of the same forward pass (for sanity checking)."""
    emb = jnp.take(params["embedding"], x_ids, axis=0)
    B, T, _ = emb.shape
    e = jnp.broadcast_to(emo[:, None, :], (B, T, emo.shape[-1]))
    inp = jnp.concatenate([emb, e], axis=2)
    H = params["w_hh"].shape[0]

    def step(carry, x_t):
        h, c = carry
        gates = x_t @ params["w_ih"] + h @ params["w_hh"] + params["b"][0]
        i = jax.nn.sigmoid(gates[:, 0 * H:1 * H])
        f = jax.nn.sigmoid(gates[:, 1 * H:2 * H])
        g = jnp.tanh(gates[:, 2 * H:3 * H])
        o = jax.nn.sigmoid(gates[:, 3 * H:4 * H])
        c = f * c + i * g
        h = o * jnp.tanh(c)
        return (h, c), h

    h0 = jnp.zeros((B, H), jnp.float32)
    c0 = jnp.zeros((B, H), jnp.float32)
    _, hs = jax.lax.scan(step, (h0, c0), jnp.transpose(inp, (1, 0, 2)))
    out = jnp.transpose(hs, (1, 0, 2))                               # (B, T, H)
    return out @ params["w_fc"] + params["b_fc"][0]


def init_params(key, vocab_size, embedding_dim, hidden_dim, emotion_dim):
    d_in = embedding_dim + emotion_dim
    ks = jax.random.split(key, 7)
    scale = 0.1
    params = {
        "embedding": scale * jax.random.normal(ks[0], (vocab_size, embedding_dim), jnp.float32),
        # PyTorch LSTM stores weight_ih (4H, D_in) / weight_hh (4H, H); we keep transposes.
        "w_ih": scale * jax.random.normal(ks[1], (d_in, 4 * hidden_dim), jnp.float32),
        "w_hh": scale * jax.random.normal(ks[2], (hidden_dim, 4 * hidden_dim), jnp.float32),
        # combined bias = b_ih + b_hh
        "b": scale * jax.random.normal(ks[3], (1, 4 * hidden_dim), jnp.float32),
        "w_fc": scale * jax.random.normal(ks[4], (hidden_dim, vocab_size), jnp.float32),
        "b_fc": scale * jax.random.normal(ks[5], (1, vocab_size), jnp.float32),
    }
    return params


if __name__ == "__main__":
    # Small, deterministic config
    vocab_size, embedding_dim, hidden_dim, emotion_dim = 64, 16, 32, 8
    B, T = 2, 8

    key = jax.random.PRNGKey(0)
    k_param, k_x, k_emo = jax.random.split(key, 3)

    params = init_params(k_param, vocab_size, embedding_dim, hidden_dim, emotion_dim)
    x_ids = jax.random.randint(k_x, (B, T), 0, vocab_size, dtype=jnp.int32)
    emo = jax.random.normal(k_emo, (B, emotion_dim), jnp.float32)

    logits = jax.block_until_ready(generator_forward(x_ids, emo, params))
    ref = jax.block_until_ready(_reference_forward(x_ids, emo, params))

    assert logits.shape == (B, T, vocab_size)
    assert jnp.allclose(logits, ref, atol=2e-4, rtol=2e-4)

    print("KERNEL_OK")
</pallas_src>

<mosaic_0001>
module attributes {stable_mosaic.version = 11 : i64} {
  func.func @_lstm_recurrence_kernel(%arg0: i32, %arg1: memref<8x2x512xf32, #tpu.memory_space<vmem>>, %arg2: memref<128x512xf32, #tpu.memory_space<vmem>>, %arg3: memref<8x2x128xf32, #tpu.memory_space<vmem>>, %arg4: memref<2x128xf32, #tpu.memory_space<vmem>>, %arg5: memref<2x128xf32, #tpu.memory_space<vmem>>) attributes {dimension_semantics = [#tpu.dimension_semantics<arbitrary>], iteration_bounds = array<i64: 1>, scalar_prefetch = 0 : i64, scratch_operands = 2 : i64, tpu.core_type = #tpu.core_type<tc>, window_params = [{transform_indices = @transform_0, window_bounds = array<i64: 8, 2, 512>}, {pipeline_mode = #tpu.pipeline_mode<synchronous>, transform_indices = @transform_1, window_bounds = array<i64: 128, 512>}, {transform_indices = @transform_2, window_bounds = array<i64: 8, 2, 128>}]} {
    %c0_i32 = arith.constant 0 : i32
    %0 = arith.cmpi eq, %arg0, %c0_i32 : i32
    %1 = arith.extui %0 : i1 to i32
    %c0_i32_0 = arith.constant 0 : i32
    %2 = arith.cmpi ne, %1, %c0_i32_0 : i32
    scf.if %2 {
      %cst = arith.constant 0.000000e+00 : f32
      %14 = vector.broadcast %cst : f32 to vector<2x128xf32>
      %c0_13 = arith.constant 0 : index
      %c0_14 = arith.constant 0 : index
      %15 = vector.load %arg4[%c0_13, %c0_14] : memref<2x128xf32, #tpu.memory_space<vmem>>, vector<2x128xf32>
      tpu.vector_store %arg4[%c0_13, %c0_14], %14 {strides = array<i32>} : memref<2x128xf32, #tpu.memory_space<vmem>>, vector<2x128xf32>,
      %cst_15 = arith.constant 0.000000e+00 : f32
      %16 = vector.broadcast %cst_15 : f32 to vector<2x128xf32>
      %c0_16 = arith.constant 0 : index
      %c0_17 = arith.constant 0 : index
      %17 = vector.load %arg5[%c0_16, %c0_17] : memref<2x128xf32, #tpu.memory_space<vmem>>, vector<2x128xf32>
      tpu.vector_store %arg5[%c0_16, %c0_17], %16 {strides = array<i32>} : memref<2x128xf32, #tpu.memory_space<vmem>>, vector<2x128xf32>,
    } else {
    }
    %c0 = arith.constant 0 : index
    %c0_1 = arith.constant 0 : index
    %3 = vector.load %arg2[%c0, %c0_1] : memref<128x512xf32, #tpu.memory_space<vmem>>, vector<128x512xf32>
    %c8_i32 = arith.constant 8 : i32
    %4 = arith.muli %arg0, %c8_i32 : i32
    %c8_i32_2 = arith.constant 8 : i32
    %5 = arith.subi %c8_i32_2, %4 : i32
    %c8_i32_3 = arith.constant 8 : i32
    %6 = arith.minsi %c8_i32_3, %5 : i32
    %c0_4 = arith.constant 0 : index
    %c0_5 = arith.constant 0 : index
    %7 = vector.load %arg4[%c0_4, %c0_5] : memref<2x128xf32, #tpu.memory_space<vmem>>, vector<2x128xf32>
    %c0_6 = arith.constant 0 : index
    %c0_7 = arith.constant 0 : index
    %8 = vector.load %arg5[%c0_6, %c0_7] : memref<2x128xf32, #tpu.memory_space<vmem>>, vector<2x128xf32>
    %c0_i32_8 = arith.constant 0 : i32
    %9 = arith.subi %6, %c0_i32_8 : i32
    %10 = arith.addi %c0_i32_8, %9 : i32
    %c1_i32 = arith.constant 1 : i32
    %11:2 = scf.for %arg6 = %c0_i32_8 to %10 step %c1_i32 iter_args(%arg7 = %7, %arg8 = %8) -> (vector<2x128xf32>, vector<2x128xf32>)  : i32 {
      %14 = arith.index_cast %arg6 : i32 to index
      %c0_13 = arith.constant 0 : index
      %c0_14 = arith.constant 0 : index
      %15 = vector.load %arg1[%14, %c0_13, %c0_14] : memref<8x2x512xf32, #tpu.memory_space<vmem>>, vector<1x2x512xf32>
      %16 = vector.shape_cast %15 : vector<1x2x512xf32> to vector<2x512xf32>
      %cst = arith.constant dense<0.000000e+00> : vector<2x512xf32>
      %17 = tpu.matmul %arg7, %3, %cst {dimension_numbers = #tpu.dot_dimension_numbers<[1], [0], [0], [1], [0, 0, 1, 1], [], []>} : vector<2x128xf32>, vector<128x512xf32>, vector<2x512xf32> -> vector<2x512xf32>
      %18 = arith.addf %16, %17 : vector<2x512xf32>
      %19 = vector.extract_strided_slice %18 {offsets = [0, 0], sizes = [2, 128], strides = [1, 1]} : vector<2x512xf32> to vector<2x128xf32>
      %20 = arith.negf %19 : vector<2x128xf32>
      %21 = math.exp %20 : vector<2x128xf32>
      %cst_15 = arith.constant 1.000000e+00 : f32
      %22 = vector.broadcast %cst_15 : f32 to vector<2x128xf32>
      %23 = arith.addf %22, %21 : vector<2x128xf32>
      %24 = arith.divf %22, %23 : vector<2x128xf32>
      %25 = vector.extract_strided_slice %18 {offsets = [0, 128], sizes = [2, 128], strides = [1, 1]} : vector<2x512xf32> to vector<2x128xf32>
      %26 = arith.negf %25 : vector<2x128xf32>
      %27 = math.exp %26 : vector<2x128xf32>
      %cst_16 = arith.constant 1.000000e+00 : f32
      %28 = vector.broadcast %cst_16 : f32 to vector<2x128xf32>
      %29 = arith.addf %28, %27 : vector<2x128xf32>
      %30 = arith.divf %28, %29 : vector<2x128xf32>
      %31 = vector.extract_strided_slice %18 {offsets = [0, 256], sizes = [2, 128], strides = [1, 1]} : vector<2x512xf32> to vector<2x128xf32>
      %32 = math.tanh %31 : vector<2x128xf32>
      %33 = vector.extract_strided_slice %18 {offsets = [0, 384], sizes = [2, 128], strides = [1, 1]} : vector<2x512xf32> to vector<2x128xf32>
      %34 = arith.negf %33 : vector<2x128xf32>
      %35 = math.exp %34 : vector<2x128xf32>
      %cst_17 = arith.constant 1.000000e+00 : f32
      %36 = vector.broadcast %cst_17 : f32 to vector<2x128xf32>
      %37 = arith.addf %36, %35 : vector<2x128xf32>
      %38 = arith.divf %36, %37 : vector<2x128xf32>
      %39 = arith.mulf %30, %arg8 : vector<2x128xf32>
      %40 = arith.mulf %24, %32 : vector<2x128xf32>
      %41 = arith.addf %39, %40 : vector<2x128xf32>
      %42 = math.tanh %41 : vector<2x128xf32>
      %43 = arith.mulf %38, %42 : vector<2x128xf32>
      %44 = arith.index_cast %arg6 : i32 to index
      %c0_18 = arith.constant 0 : index
      %c0_19 = arith.constant 0 : index
      %45 = vector.load %arg3[%44, %c0_18, %c0_19] : memref<8x2x128xf32, #tpu.memory_space<vmem>>, vector<1x2x128xf32>
      %46 = vector.shape_cast %45 : vector<1x2x128xf32> to vector<2x128xf32>
      %47 = vector.shape_cast %43 : vector<2x128xf32> to vector<1x2x128xf32>
      tpu.vector_store %arg3[%44, %c0_18, %c0_19], %47 {strides = array<i32>} : memref<8x2x128xf32, #tpu.memory_space<vmem>>, vector<1x2x128xf32>,
      scf.yield %43, %41 : vector<2x128xf32>, vector<2x128xf32>
    }
    %c0_9 = arith.constant 0 : index
    %c0_10 = arith.constant 0 : index
    %12 = vector.load %arg4[%c0_9, %c0_10] : memref<2x128xf32, #tpu.memory_space<vmem>>, vector<2x128xf32>
    tpu.vector_store %arg4[%c0_9, %c0_10], %11#0 {strides = array<i32>} : memref<2x128xf32, #tpu.memory_space<vmem>>, vector<2x128xf32>,
    %c0_11 = arith.constant 0 : index
    %c0_12 = arith.constant 0 : index
    %13 = vector.load %arg5[%c0_11, %c0_12] : memref<2x128xf32, #tpu.memory_space<vmem>>, vector<2x128xf32>
    tpu.vector_store %arg5[%c0_11, %c0_12], %11#1 {strides = array<i32>} : memref<2x128xf32, #tpu.memory_space<vmem>>, vector<2x128xf32>,
    return
  }
  func.func @transform_0(%arg0: i32) -> (i32, i32, i32) {
    %c0_i32 = arith.constant 0 : i32
    %c0_i32_0 = arith.constant 0 : i32
    %c0_i32_1 = arith.constant 0 : i32
    return %arg0, %c0_i32, %c0_i32_0 : i32, i32, i32
  }
  func.func @transform_1(%arg0: i32) -> (i32, i32) {
    %c0_i32 = arith.constant 0 : i32
    %c0_i32_0 = arith.constant 0 : i32
    %c0_i32_1 = arith.constant 0 : i32
    return %c0_i32, %c0_i32_0 : i32, i32
  }
  func.func @transform_2(%arg0: i32) -> (i32, i32, i32) {
    %c0_i32 = arith.constant 0 : i32
    %c0_i32_0 = arith.constant 0 : i32
    %c0_i32_1 = arith.constant 0 : i32
    return %arg0, %c0_i32, %c0_i32_0 : i32, i32, i32
  }
}

</mosaic_0001>

<llo_original>
// kernel: tpu_custom_call.1
$region0: #{tpu_custom_call.1}
  #allocation0 [shape = 'u32[]', space=smem, size = 0x4, offset = 0x4, fixed_abs, tag = 'smem constant byte address 0x4 - core index']
  #allocation1 [shape = 'u32[72,128]{1,0:T(1,128)}', space=vmem, size = 0x9000, scoped, tag = 'internal scratch']
  #allocation2 [shape = 'f32[2,128]{1,0:T(2,128)}', space=vmem, size = 0x400, scoped, tag = 'scratch operand']
  #allocation3 [shape = 'f32[2,128]{1,0:T(2,128)}', space=vmem, size = 0x400, scoped, tag = 'scratch operand']
  %s0 = inlined_call_operand.hbm [shape: f32[8,2,512], index: 0, kind: input, shape index: {}]
  %s1 = inlined_call_operand.hbm [shape: f32[128,512], index: 1, kind: input, shape index: {}]
  %s2 = inlined_call_operand.hbm [shape: f32[8,2,128], index: 2, kind: output, shape index: {}]
  %s3 = sld [smem:[#allocation0]]
  $region37: #{tpu_custom_call.1} parent=0
    _
  %s5 = ssub.s32 1, %s3
  %s6 = scalar_select 0, %s5, %s3
  $region1: #{tpu_custom_call.1} parent=0
    #allocation4 [shape = 'u8[32768]{0}', space=vmem, size = 0x8000, scoped, tag = 'input window, operand 0, single buffered']
    #allocation5 [shape = 's32[1]{0}', space=sflag, size = 0x4, scoped, tag = 'scoped memory for tpu_custom_call.1']
    #allocation6 [shape = 's32[1]{0}', space=sflag, size = 0x4, scoped, tag = 'scoped memory for tpu_custom_call.1']
    #allocation7 [shape = 'u8[262144]{0}', space=vmem, size = 0x40000, scoped, tag = 'input window, operand 1, single buffered']
    #allocation8 [shape = 's32[1]{0}', space=sflag, size = 0x4, scoped, tag = 'scoped memory for tpu_custom_call.1']
    #allocation9 [shape = 'u8[8192]{0}', space=vmem, size = 0x2000, scoped, tag = 'output window, operand 0, single buffered']
    %7 = vsyncpa [#allocation5], 0
    %8 = vsyncpa [#allocation8], 0
    %9 = vsyncpa [#allocation6], 0
    // Predicated region
    $region2: #{tpu_custom_call.1} parent=1 // pred_check
      _
    $region3: #{tpu_custom_call.1} parent=1 // pred_check_branch
      %11 = sbr.rel (0) target = $region5
    $region4: #{tpu_custom_call.1} parent=1 // pred_region
      %13 = vsyncadd [#allocation5], 0
      %s14 = sshll.u32 %s0, 4
      %s15 = int_to_ptr.hbm [resolvable:$true] %s14
      %s16 = sshll.u32 [#allocation4], 4
      %s17 = int_to_ptr.vmem [resolvable:$true] %s16
      %22 = dma.hbm_to_vmem [thread:$0]  %s15, 1024, %s17, [#allocation5], 128, 128, 8
    $region5: #{tpu_custom_call.1} parent=1 // pred_fallthru
      _
    // Predicated region
    $region6: #{tpu_custom_call.1} parent=1 // pred_check
      _
    $region7: #{tpu_custom_call.1} parent=1 // pred_check_branch
      %24 = sbr.rel (0) target = $region9
    $region8: #{tpu_custom_call.1} parent=1 // pred_region
      %26 = vsyncadd [#allocation8], 0
      %s27 = sshll.u32 %s1, 4
      %s28 = int_to_ptr.hbm [resolvable:$true] %s27
      %s29 = sshll.u32 [#allocation7], 4
      %s30 = int_to_ptr.vmem [resolvable:$true] %s29
      %35 = dma.hbm_to_vmem [thread:$0]  %s28, 8192, %s30, [#allocation8], 512, 512, 32
    $region9: #{tpu_custom_call.1} parent=1 // pred_fallthru
      _
    // Predicated region
    $region10: #{tpu_custom_call.1} parent=1 // pred_check
      _
    $region11: #{tpu_custom_call.1} parent=1 // pred_check_branch
      %37 = sbr.rel (0) target = $region13
    $region12: #{tpu_custom_call.1} parent=1 // pred_region
      %39 = dma.done [#allocation5], 1024
    $region13: #{tpu_custom_call.1} parent=1 // pred_fallthru
      _
    // Predicated region
    $region14: #{tpu_custom_call.1} parent=1 // pred_check
      _
    $region15: #{tpu_custom_call.1} parent=1 // pred_check_branch
      %41 = sbr.rel (0) target = $region17
    $region16: #{tpu_custom_call.1} parent=1 // pred_region
      %43 = dma.done [#allocation8], 8192
    $region17: #{tpu_custom_call.1} parent=1 // pred_fallthru
      _
    %p44 = scmp.eq.s32.totalorder 0, 0
    // Predicated region
    $region18: #{tpu_custom_call.1} parent=1 // pred_check
      %p45 = pneg %p44
    $region19: #{tpu_custom_call.1} parent=1 // pred_check_branch
      %47 = sbr.rel (%p45) target = $region21
    $region20: #{tpu_custom_call.1} parent=1 // pred_region
      %48 = vst [vmem:[#allocation2] sm:$0x3] 0.0
      %49 = vst [vmem:[#allocation3] sm:$0x3] 0.0
    $region21: #{tpu_custom_call.1} parent=1 // pred_fallthru
      _
    %v50 = vld [vmem:[#allocation7] sm:$0xff]
    %v51 = vld [vmem:[#allocation7 + $0x8] sm:$0xff]
    %v52 = vld [vmem:[#allocation7 + $0x10] sm:$0xff]
    %v53 = vld [vmem:[#allocation7 + $0x18] sm:$0xff]
    %v54 = vld [vmem:[#allocation7 + $0x20] sm:$0xff]
    %v55 = vld [vmem:[#allocation7 + $0x28] sm:$0xff]
    %v56 = vld [vmem:[#allocation7 + $0x30] sm:$0xff]
    %v57 = vld [vmem:[#allocation7 + $0x38] sm:$0xff]
    %v58 = vld [vmem:[#allocation7 + $0x40] sm:$0xff]
    %v59 = vld [vmem:[#allocation7 + $0x48] sm:$0xff]
    %v60 = vld [vmem:[#allocation7 + $0x50] sm:$0xff]
    %v61 = vld [vmem:[#allocation7 + $0x58] sm:$0xff]
    %v62 = vld [vmem:[#allocation7 + $0x60] sm:$0xff]
    %v63 = vld [vmem:[#allocation7 + $0x68] sm:$0xff]
    %v64 = vld [vmem:[#allocation7 + $0x70] sm:$0xff]
    %v65 = vld [vmem:[#allocation7 + $0x78] sm:$0xff]
    %v66 = vld [vmem:[#allocation7 + $0x80] sm:$0xff]
    %v67 = vld [vmem:[#allocation7 + $0x88] sm:$0xff]
    %v68 = vld [vmem:[#allocation7 + $0x90] sm:$0xff]
    %v69 = vld [vmem:[#allocation7 + $0x98] sm:$0xff]
    %v70 = vld [vmem:[#allocation7 + $0xa0] sm:$0xff]
    %v71 = vld [vmem:[#allocation7 + $0xa8] sm:$0xff]
    %v72 = vld [vmem:[#allocation7 + $0xb0] sm:$0xff]
    %v73 = vld [vmem:[#allocation7 + $0xb8] sm:$0xff]
    %v74 = vld [vmem:[#allocation7 + $0xc0] sm:$0xff]
    %v75 = vld [vmem:[#allocation7 + $0xc8] sm:$0xff]
    %v76 = vld [vmem:[#allocation7 + $0xd0] sm:$0xff]
    %v77 = vld [vmem:[#allocation7 + $0xd8] sm:$0xff]
    %v78 = vld [vmem:[#allocation7 + $0xe0] sm:$0xff]
    %v79 = vld [vmem:[#allocation7 + $0xe8] sm:$0xff]
    %v80 = vld [vmem:[#allocation7 + $0xf0] sm:$0xff]
    %v81 = vld [vmem:[#allocation7 + $0xf8] sm:$0xff]
    %v82 = vld [vmem:[#allocation7 + $0x100] sm:$0xff]
    %v83 = vld [vmem:[#allocation7 + $0x108] sm:$0xff]
    %v84 = vld [vmem:[#allocation7 + $0x110] sm:$0xff]
    %v85 = vld [vmem:[#allocation7 + $0x118] sm:$0xff]
    %v86 = vld [vmem:[#allocation7 + $0x120] sm:$0xff]
    %v87 = vld [vmem:[#allocation7 + $0x128] sm:$0xff]
    %v88 = vld [vmem:[#allocation7 + $0x130] sm:$0xff]
    %v89 = vld [vmem:[#allocation7 + $0x138] sm:$0xff]
    %v90 = vld [vmem:[#allocation7 + $0x140] sm:$0xff]
    %v91 = vld [vmem:[#allocation7 + $0x148] sm:$0xff]
    %v92 = vld [vmem:[#allocation7 + $0x150] sm:$0xff]
    %v93 = vld [vmem:[#allocation7 + $0x158] sm:$0xff]
    %v94 = vld [vmem:[#allocation7 + $0x160] sm:$0xff]
    %v95 = vld [vmem:[#allocation7 + $0x168] sm:$0xff]
    %v96 = vld [vmem:[#allocation7 + $0x170] sm:$0xff]
    %v97 = vld [vmem:[#allocation7 + $0x178] sm:$0xff]
    %v98 = vld [vmem:[#allocation7 + $0x180] sm:$0xff]
    %v99 = vld [vmem:[#allocation7 + $0x188] sm:$0xff]
    %v100 = vld [vmem:[#allocation7 + $0x190] sm:$0xff]
    %v101 = vld [vmem:[#allocation7 + $0x198] sm:$0xff]
    %v102 = vld [vmem:[#allocation7 + $0x1a0] sm:$0xff]
    %v103 = vld [vmem:[#allocation7 + $0x1a8] sm:$0xff]
    %v104 = vld [vmem:[#allocation7 + $0x1b0] sm:$0xff]
    %v105 = vld [vmem:[#allocation7 + $0x1b8] sm:$0xff]
    %v106 = vld [vmem:[#allocation7 + $0x1c0] sm:$0xff]
    %v107 = vld [vmem:[#allocation7 + $0x1c8] sm:$0xff]
    %v108 = vld [vmem:[#allocation7 + $0x1d0] sm:$0xff]
    %v109 = vld [vmem:[#allocation7 + $0x1d8] sm:$0xff]
    %v110 = vld [vmem:[#allocation7 + $0x1e0] sm:$0xff]
    %v111 = vld [vmem:[#allocation7 + $0x1e8] sm:$0xff]
    %v112 = vld [vmem:[#allocation7 + $0x1f0] sm:$0xff]
    %v113 = vld [vmem:[#allocation7 + $0x1f8] sm:$0xff]
    %s114 = smul.u32 0, 8
    %s115 = ssub.s32 8, %s114
    %p116 = scmp.lt.s32.totalorder %s115, 8
    %s117 = scalar_select %p116, %s115, 8
    %v118 = vld [vmem:[#allocation2] sm:$0x3]
    %v119 = vld [vmem:[#allocation3] sm:$0x3]
    // While loop
    $region22: #{tpu_custom_call.1} parent=1 // loop_pre_header
      _
    $region23: #{tpu_custom_call.1} parent=1 // loop_header
      %s121 = sphi 0, %s123
      %p122 = scmp.ge.s32.totalorder %s121, %s117
      %v126 = vphi %v118, %v296
      %v127 = vphi %v119, %v294
    $region24: #{tpu_custom_call.1} parent=1 // loop_header_branch
      %125 = sbr.rel (%p122) target = $region28
    $region25: #{tpu_custom_call.1} parent=1 // loop_body
      %s128 = smul.u32 %s121, 4
      %s129 = smul.addr %s128, 2
      %s130 = scalar_lea.vmem [#allocation4], %s129
      %v131 = vld [vmem:[%s130] sm:$0xff]
      %132 = vmatpush.msra.mxu0 %v110
      %133 = vmatpush.msra.mxu0 %v106
      %134 = vmatpush.msra.mxu0 %v102
      %135 = vmatpush.msra.mxu0 %v98
      %136 = vmatpush.msra.mxu0 %v94
      %137 = vmatpush.msra.mxu0 %v90
      %138 = vmatpush.msra.mxu0 %v86
      %139 = vmatpush.msra.mxu0 %v82
      %140 = vmatpush.msra.mxu0 %v78
      %141 = vmatpush.msra.mxu0 %v74
      %142 = vmatpush.msra.mxu0 %v70
      %143 = vmatpush.msra.mxu0 %v66
      %144 = vmatpush.msra.mxu0 %v62
      %145 = vmatpush.msra.mxu0 %v58
      %146 = vmatpush.msra.mxu0 %v54
      %147 = vmatpush.msra.mxu0 %v50
      %148 = vmatmul.f32.gmra.mxu0 %v126
      %v149 = vpop.f32.mrf.mxu0
      %v150 = vadd.f32 0.0, %v149
      %151 = vdwg.mxu0
      %152 = vmatpush.msra.mxu0 %v111
      %153 = vmatpush.msra.mxu0 %v107
      %154 = vmatpush.msra.mxu0 %v103
      %155 = vmatpush.msra.mxu0 %v99
      %156 = vmatpush.msra.mxu0 %v95
      %157 = vmatpush.msra.mxu0 %v91
      %158 = vmatpush.msra.mxu0 %v87
      %159 = vmatpush.msra.mxu0 %v83
      %160 = vmatpush.msra.mxu0 %v79
      %161 = vmatpush.msra.mxu0 %v75
      %162 = vmatpush.msra.mxu0 %v71
      %163 = vmatpush.msra.mxu0 %v67
      %164 = vmatpush.msra.mxu0 %v63
      %165 = vmatpush.msra.mxu0 %v59
      %166 = vmatpush.msra.mxu0 %v55
      %167 = vmatpush.msra.mxu0 %v51
      %168 = vmatmul.f32.gmra.mxu0 %v126
      %v169 = vpop.f32.mrf.mxu0
      %v170 = vadd.f32 0.0, %v169
      %171 = vdwg.mxu0
      %172 = vmatpush.msra.mxu0 %v112
      %173 = vmatpush.msra.mxu0 %v108
      %174 = vmatpush.msra.mxu0 %v104
      %175 = vmatpush.msra.mxu0 %v100
      %176 = vmatpush.msra.mxu0 %v96
      %177 = vmatpush.msra.mxu0 %v92
      %178 = vmatpush.msra.mxu0 %v88
      %179 = vmatpush.msra.mxu0 %v84
      %180 = vmatpush.msra.mxu0 %v80
      %181 = vmatpush.msra.mxu0 %v76
      %182 = vmatpush.msra.mxu0 %v72
      %183 = vmatpush.msra.mxu0 %v68
      %184 = vmatpush.msra.mxu0 %v64
      %185 = vmatpush.msra.mxu0 %v60
      %186 = vmatpush.msra.mxu0 %v56
      %187 = vmatpush.msra.mxu0 %v52
      %188 = vmatmul.f32.gmra.mxu0 %v126
      %v189 = vpop.f32.mrf.mxu0
      %v190 = vadd.f32 0.0, %v189
      %191 = vdwg.mxu0
      %192 = vmatpush.msra.mxu0 %v113
      %193 = vmatpush.msra.mxu0 %v109
      %194 = vmatpush.msra.mxu0 %v105
      %195 = vmatpush.msra.mxu0 %v101
      %196 = vmatpush.msra.mxu0 %v97
      %197 = vmatpush.msra.mxu0 %v93
      %198 = vmatpush.msra.mxu0 %v89
      %199 = vmatpush.msra.mxu0 %v85
      %200 = vmatpush.msra.mxu0 %v81
      %201 = vmatpush.msra.mxu0 %v77
      %202 = vmatpush.msra.mxu0 %v73
      %203 = vmatpush.msra.mxu0 %v69
      %204 = vmatpush.msra.mxu0 %v65
      %205 = vmatpush.msra.mxu0 %v61
      %206 = vmatpush.msra.mxu0 %v57
      %207 = vmatpush.msra.mxu0 %v53
      %208 = vmatmul.f32.gmra.mxu0 %v126
      %v209 = vpop.f32.mrf.mxu0
      %v210 = vadd.f32 0.0, %v209
      %211 = vdwg.mxu0
      %v216 = vrot.slane %v170, 6
      %v217 = vrot.slane %v190, 4
      %v218 = vrot.slane %v210, 2
      %vm219 = vcmask 1041408
      %v220 = vsel %vm219, %v150, %v216
      %vm221 = vcmask 1045508
      %v222 = vsel %vm221, %v217, %v218
      %vm223 = vcmask 1043456
      %v224 = vsel %vm223, %v220, %v222
      %v226 = vadd.f32 %v131, %v224
      %v227 = vxor.u32 %v226, 2147483648
      %v228 = vmul.f32 %v227, 1.442695
      %v229 = vpow.pop %v228
      %v230 = vadd.f32 %v229, 1.0
      %v231 = vrcp.pop %v230
      %v232 = vmul.f32 %v230, %v231
      %v233 = vsub.f32 1.0, %v232
      %v234 = vmul.f32 %v231, %v233
      %v235 = vadd.f32 %v231, %v234
      %vm236 = vweird.f32 %v230
      %vm237 = vweird.f32 %v231
      %vm238 = vmor %vm236, %vm237
      %v239 = vsel %vm238, %v231, %v235
      %v240 = vand.u32 2147483647, %v230
      %vm241 = vcmp.eq.f32.partialorder %v240, 8.507059e+37
      %v242 = vand.u32 %v230, 2147483648
      %v243 = vor.u32 1.1754944e-38, %v242
      %v244 = vsel %vm241, %v243, %v239
      %v245 = vmul.f32 1.0, %v244
      %v247 = vrot.slane %v226, 2
      %v249 = vxor.u32 %v247, 2147483648
      %v250 = vmul.f32 %v249, 1.442695
      %v251 = vpow.pop %v250
      %v252 = vadd.f32 %v251, 1.0
      %v253 = vrcp.pop %v252
      %v254 = vmul.f32 %v252, %v253
      %v255 = vsub.f32 1.0, %v254
      %v256 = vmul.f32 %v253, %v255
      %v257 = vadd.f32 %v253, %v256
      %vm258 = vweird.f32 %v252
      %vm259 = vweird.f32 %v253
      %vm260 = vmor %vm258, %vm259
      %v261 = vsel %vm260, %v253, %v257
      %v262 = vand.u32 2147483647, %v252
      %vm263 = vcmp.eq.f32.partialorder %v262, 8.507059e+37
      %v264 = vand.u32 %v252, 2147483648
      %v265 = vor.u32 1.1754944e-38, %v264
      %v266 = vsel %vm263, %v265, %v261
      %v267 = vmul.f32 1.0, %v266
      %v268 = vrot.slane %v226, 4
      %v270 = vtanh.pop %v268
      %v271 = vrot.slane %v226, 6
      %v273 = vxor.u32 %v271, 2147483648
      %v274 = vmul.f32 %v273, 1.442695
      %v275 = vpow.pop %v274
      %v276 = vadd.f32 %v275, 1.0
      %v277 = vrcp.pop %v276
      %v278 = vmul.f32 %v276, %v277
      %v279 = vsub.f32 1.0, %v278
      %v280 = vmul.f32 %v277, %v279
      %v281 = vadd.f32 %v277, %v280
      %vm282 = vweird.f32 %v276
      %vm283 = vweird.f32 %v277
      %vm284 = vmor %vm282, %vm283
      %v285 = vsel %vm284, %v277, %v281
      %v286 = vand.u32 2147483647, %v276
      %vm287 = vcmp.eq.f32.partialorder %v286, 8.507059e+37
      %v288 = vand.u32 %v276, 2147483648
      %v289 = vor.u32 1.1754944e-38, %v288
      %v290 = vsel %vm287, %v289, %v285
      %v291 = vmul.f32 1.0, %v290
      %v292 = vmul.f32 %v267, %v127
      %v293 = vmul.f32 %v245, %v270
      %v294 = vadd.f32 %v292, %v293
      %v295 = vtanh.pop %v294
      %v296 = vmul.f32 %v291, %v295
      %s297 = smul.u32 %s121, 2
      %s298 = scalar_lea.vmem [#allocation9], %s297
      %299 = vst [vmem:[%s298] sm:$0x3] %v296
    $region26: #{tpu_custom_call.1} parent=1 // loop_footer
      %s123 = sadd.s32 %s121, 1
    $region27: #{tpu_custom_call.1} parent=1 // loop_footer_branch
      %120 = sbr.rel target = $region23
    $region28: #{tpu_custom_call.1} parent=1 // loop_exit
      _
    %300 = vst [vmem:[#allocation2] sm:$0x3] %v126
    %301 = vst [vmem:[#allocation3] sm:$0x3] %v127
    // Predicated region
    $region29: #{tpu_custom_call.1} parent=1 // pred_check
      _
    $region30: #{tpu_custom_call.1} parent=1 // pred_check_branch
      %303 = sbr.rel (0) target = $region32
    $region31: #{tpu_custom_call.1} parent=1 // pred_region
      %305 = vsyncadd [#allocation6], 0
      %s306 = sshll.u32 [#allocation9], 4
      %s307 = int_to_ptr.vmem [resolvable:$true] %s306
      %s308 = sshll.u32 %s2, 4
      %s309 = int_to_ptr.hbm [resolvable:$true] %s308
      %314 = dma.vmem_to_hbm [thread:$0]  %s307, 256, %s309, [#allocation6], 32, 32, 2
    $region32: #{tpu_custom_call.1} parent=1 // pred_fallthru
      _
    // Predicated region
    $region33: #{tpu_custom_call.1} parent=1 // pred_check
      _
    $region34: #{tpu_custom_call.1} parent=1 // pred_check_branch
      %316 = sbr.rel (0) target = $region36
    $region35: #{tpu_custom_call.1} parent=1 // pred_region
      %318 = dma.done [#allocation6], 256
    $region36: #{tpu_custom_call.1} parent=1 // pred_fallthru
      _
    %319 = vsyncpa [#allocation5], 1
    %320 = vsyncpa [#allocation8], 1
    %321 = vsyncpa [#allocation6], 1

</llo_original>
